<compile_context>
chip_gen: v7x
topology: tpu7x:2x2x1
jax: 0.10.0
libtpu: 0.0.40
codegen_flags: <defaults>
</compile_context>

<pallas_src>
import functools

import jax
import jax.numpy as jnp
from jax.experimental import pallas as pl
from jax.experimental.pallas import tpu as pltpu


def _round_up(x, m):
    return (x + m - 1) // m * m


def _gelu_tanh(x):
    # 0.5 * x * (1 + tanh(sqrt(2/pi) * (x + 0.044715 * x^3)))  -- GPT-2 approx GELU, f32
    c = jnp.sqrt(2.0 / jnp.pi).astype(x.dtype)
    return 0.5 * x * (1.0 + jnp.tanh(c * (x + 0.044715 * (x * x * x))))


def ffn_kernel(x_ref, w1_ref, b1_ref, w2_ref, b2_ref, o_ref, h_ref, acc_ref):
    j = pl.program_id(1)                 # hidden-dim (H) tile, reduction of 2nd matmul
    k = pl.program_id(2)                 # K (=E) tile, reduction of 1st matmul
    nj = pl.num_programs(1)
    nk = pl.num_programs(2)

    @pl.when(k == 0)
    def _init_h():
        h_ref[...] = jnp.zeros_like(h_ref)

    # First linear, accumulated over the K grid axis: (tm, tk) @ (tk, th) -> f32
    h_ref[...] += jnp.dot(x_ref[...], w1_ref[...], preferred_element_type=jnp.float32)

    @pl.when(jnp.logical_and(k == nk - 1, j == 0))
    def _init_acc():
        acc_ref[...] = jnp.zeros_like(acc_ref)

    @pl.when(k == nk - 1)
    def _second_matmul():
        # Bias + GELU strictly in f32 (VPU/EUP), then (tm, th) @ (th, E) -> f32 accumulate.
        g = _gelu_tanh(h_ref[...] + b1_ref[...])
        acc_ref[...] += jnp.dot(g.astype(w2_ref.dtype), w2_ref[...],
                                preferred_element_type=jnp.float32)

    @pl.when(jnp.logical_and(k == nk - 1, j == nj - 1))
    def _finalize():
        o_ref[...] = (acc_ref[...] + b2_ref[...]).astype(o_ref.dtype)


def prepare_ffn_params(w1, b1, w2, b2):
    """One-time (outside the jitted forward) pad-to-128 and bf16 cast of the FFN weights.

    w1: (E, H); b1: (H,); w2: (H, E); b2: (E,).  When E and H are already multiples of 128
    (the common case), this is just a cast -- no padded copies are written per forward call.
    """
    E, H = w1.shape
    E_p, H_p = _round_up(E, 128), _round_up(H, 128)

    if (E_p, H_p) == (E, H):
        w1_p = w1.astype(jnp.bfloat16)
        w2_p = w2.astype(jnp.bfloat16)
        b1_p = b1.astype(jnp.float32).reshape(1, H)
        b2_p = b2.astype(jnp.float32).reshape(1, E)
    else:
        w1_p = jnp.zeros((E_p, H_p), jnp.bfloat16).at[:E, :H].set(w1.astype(jnp.bfloat16))
        w2_p = jnp.zeros((H_p, E_p), jnp.bfloat16).at[:H, :E].set(w2.astype(jnp.bfloat16))
        b1_p = jnp.zeros((1, H_p), jnp.float32).at[0, :H].set(b1.astype(jnp.float32))
        b2_p = jnp.zeros((1, E_p), jnp.float32).at[0, :E].set(b2.astype(jnp.float32))
    return w1_p, b1_p, w2_p, b2_p


@functools.partial(jax.jit, static_argnames=("tm", "th", "tk"))
def feed_forward(x, w1_p, b1_p, w2_p, b2_p, *, tm=512, th=512, tk=2048):
    """x: (B, S, E) f32/bf16; padded bf16/f32 params from prepare_ffn_params."""
    B, S, E = x.shape
    M = B * S
    out_dtype = x.dtype
    out_itemsize = jnp.dtype(out_dtype).itemsize

    E_in, H_p = w1_p.shape          # padded (multiples of 128)
    E_out = w2_p.shape[1]           # == E_in, lane-dense output width

    # ---- static tile geometry ----
    tm = _round_up(min(tm, _round_up(M, 8)), 8)        # row tile (multiple of 8)
    M_p = _round_up(M, tm)
    th = _round_up(min(th, H_p), 128)                  # hidden tile (multiple of 128)
    tk = _round_up(min(tk, E_in), 128)                 # K tile of first matmul
    H_pp = _round_up(H_p, th)
    K_pp = _round_up(E_in, tk)

    # ---- activations: pad directly in bf16 (no f32 intermediate) ----
    x2d = x.reshape(M, E).astype(jnp.bfloat16)
    if (M_p != M) or (K_pp != E):
        x2d = jnp.pad(x2d, ((0, M_p - M), (0, K_pp - E)))

    # Rare: extra weight padding only when the tile sizes don't divide the 128-padded dims.
    if (K_pp != E_in) or (H_pp != H_p):
        w1_p = jnp.pad(w1_p, ((0, K_pp - E_in), (0, H_pp - H_p)))
        b1_p = jnp.pad(b1_p, ((0, 0), (0, H_pp - H_p)))
        w2_p = jnp.pad(w2_p, ((0, H_pp - H_p), (0, 0)))

    grid = (M_p // tm, H_pp // th, K_pp // tk)
    n_m, n_h, n_k = grid

    # ---- explicit scoped-VMEM limit derived from the actual double-buffered footprint ----
    footprint = (2 * tm * tk * 2          # x block (bf16, double-buffered)
                 + 2 * tk * th * 2        # W1 block
                 + 2 * th * 4             # b1 block
                 + 2 * th * E_out * 2     # W2 block
                 + 2 * E_out * 4          # b2 block
                 + 2 * tm * E_out * out_itemsize   # output block
                 + tm * th * 4            # h scratch (f32)
                 + tm * E_out * 4)        # acc scratch (f32)
    vmem_limit = int(min(max(int(footprint * 1.2) + (4 << 20), 16 << 20), 96 << 20))

    # Advisory cost: weights re-streamed once per M tile; x re-streamed per H tile iff nk>1.
    cost = pl.CostEstimate(
        flops=int(2 * M_p * K_pp * H_pp + 2 * M_p * H_pp * E_out),
        transcendentals=int(M_p * H_pp),
        bytes_accessed=int(
            x2d.size * 2 * (n_h if n_k > 1 else 1)
            + (w1_p.size * 2 + w2_p.size * 2 + b1_p.size * 4) * n_m
            + b2_p.size * 4
            + M_p * E_out * out_itemsize),
    )

    # TODO(synk): on v7x with small M (decode), split E_out into two parallel column halves
    # so the second TensorCore isn't idle; also consider pl.Buffered(1) on out_specs and a
    # bf16 output to reclaim VMEM for a larger tm on the 64 MiB chip.
    out2d = pl.pallas_call(
        ffn_kernel,
        out_shape=jax.ShapeDtypeStruct((M_p, E_out), out_dtype),
        grid_spec=pltpu.PrefetchScalarGridSpec(
            num_scalar_prefetch=0,
            grid=grid,
            in_specs=[
                pl.BlockSpec((tm, tk), lambda i, j, k: (i, k)),    # x K-slab (streamed)
                pl.BlockSpec((tk, th), lambda i, j, k: (k, j)),    # W1 slab (streamed)
                pl.BlockSpec((1, th), lambda i, j, k: (0, j)),     # b1 slab (f32)
                pl.BlockSpec((th, E_out), lambda i, j, k: (j, 0)),  # W2 slab (streamed)
                pl.BlockSpec((1, E_out), lambda i, j, k: (0, 0)),   # b2 (f32, resident)
            ],
            out_specs=pl.BlockSpec((tm, E_out), lambda i, j, k: (i, 0)),  # resident over j,k
            scratch_shapes=[
                pltpu.VMEM((tm, th), jnp.float32),      # h accumulator (1st matmul)
                pltpu.VMEM((tm, E_out), jnp.float32),   # output accumulator (2nd matmul)
            ],
        ),
        compiler_params=pltpu.CompilerParams(
            dimension_semantics=("parallel", "arbitrary", "arbitrary"),
            vmem_limit_bytes=vmem_limit),
        cost_estimate=cost,
    )(x2d, w1_p, b1_p, w2_p, b2_p)

    return out2d[:M, :E].reshape(B, S, E)


if __name__ == "__main__":
    # cfg['emb_dim'] = 32  ->  hidden = 4 * 32 = 128
    B, S, E = 2, 8, 32
    H = 4 * E

    key = jax.random.PRNGKey(0)
    kx, kw1, kb1, kw2, kb2 = jax.random.split(key, 5)

    x = jax.random.normal(kx, (B, S, E), dtype=jnp.float32)
    w1 = jax.random.normal(kw1, (E, H), dtype=jnp.float32) * 0.02
    b1 = jax.random.normal(kb1, (H,), dtype=jnp.float32) * 0.02
    w2 = jax.random.normal(kw2, (H, E), dtype=jnp.float32) * 0.02
    b2 = jax.random.normal(kb2, (E,), dtype=jnp.float32) * 0.02

    # One-time weight preparation (pad to 128 multiples + bf16 cast), outside the forward.
    params = prepare_ffn_params(w1, b1, w2, b2)

    out = feed_forward(x, *params)
    out = jax.block_until_ready(out)

    # Reference 1: same bf16-operand / f32-accumulate recipe as the kernel (tight check).
    xb = x.reshape(-1, E).astype(jnp.bfloat16)
    h_ref = jnp.dot(xb, w1.astype(jnp.bfloat16), preferred_element_type=jnp.float32) + b1
    g_ref = 0.5 * h_ref * (1.0 + jnp.tanh(
        jnp.sqrt(2.0 / jnp.pi) * (h_ref + 0.044715 * h_ref ** 3)))
    ref_bf = (jnp.dot(g_ref.astype(jnp.bfloat16), w2.astype(jnp.bfloat16),
                      preferred_element_type=jnp.float32) + b2).reshape(B, S, E)
    assert jnp.allclose(out, ref_bf, atol=1e-3, rtol=1e-3), "mismatch vs bf16-matched reference"

    # Reference 2: pure f32 reference (semantics check; looser tolerance for bf16 operands).
    h32 = x.reshape(-1, E) @ w1 + b1
    g32 = 0.5 * h32 * (1.0 + jnp.tanh(
        jnp.sqrt(2.0 / jnp.pi) * (h32 + 0.044715 * h32 ** 3)))
    ref32 = (g32 @ w2 + b2).reshape(B, S, E)
    assert jnp.allclose(out, ref32, atol=5e-3, rtol=5e-2), "mismatch vs f32 reference"

    print("KERNEL_OK")
</pallas_src>

<mosaic_0001>
module attributes {stable_mosaic.version = 11 : i64} {
  func.func @ffn_kernel(%arg0: i32, %arg1: i32, %arg2: i32, %arg3: memref<16x128xbf16, #tpu.memory_space<vmem>>, %arg4: memref<128x128xbf16, #tpu.memory_space<vmem>>, %arg5: memref<1x128xf32, #tpu.memory_space<vmem>>, %arg6: memref<128x128xbf16, #tpu.memory_space<vmem>>, %arg7: memref<1x128xf32, #tpu.memory_space<vmem>>, %arg8: memref<16x128xf32, #tpu.memory_space<vmem>>, %arg9: memref<16x128xf32, #tpu.memory_space<vmem>>, %arg10: memref<16x128xf32, #tpu.memory_space<vmem>>) attributes {dimension_semantics = [#tpu.dimension_semantics<parallel>, #tpu.dimension_semantics<arbitrary>, #tpu.dimension_semantics<arbitrary>], iteration_bounds = array<i64: 1, 1, 1>, scalar_prefetch = 0 : i64, scratch_operands = 2 : i64, tpu.core_type = #tpu.core_type<tc>, window_params = [{transform_indices = @transform_0, window_bounds = array<i64: 16, 128>}, {transform_indices = @transform_1, window_bounds = array<i64: 128, 128>}, {transform_indices = @transform_2, window_bounds = array<i64: 1, 128>}, {transform_indices = @transform_3, window_bounds = array<i64: 128, 128>}, {pipeline_mode = #tpu.pipeline_mode<synchronous>, transform_indices = @transform_4, window_bounds = array<i64: 1, 128>}, {transform_indices = @transform_5, window_bounds = array<i64: 16, 128>}]} {
    %c0_i32 = arith.constant 0 : i32
    %0 = arith.cmpi eq, %arg2, %c0_i32 : i32
    %1 = arith.extui %0 : i1 to i32
    %c0_i32_0 = arith.constant 0 : i32
    %2 = arith.cmpi ne, %1, %c0_i32_0 : i32
    scf.if %2 {
      %cst_16 = arith.constant 0.000000e+00 : f32
      %22 = vector.broadcast %cst_16 : f32 to vector<16x128xf32>
      %c0_17 = arith.constant 0 : index
      %c0_18 = arith.constant 0 : index
      %23 = vector.load %arg9[%c0_17, %c0_18] : memref<16x128xf32, #tpu.memory_space<vmem>>, vector<16x128xf32>
      tpu.vector_store %arg9[%c0_17, %c0_18], %22 {strides = array<i32>} : memref<16x128xf32, #tpu.memory_space<vmem>>, vector<16x128xf32>,
    } else {
    }
    %c0 = arith.constant 0 : index
    %c0_1 = arith.constant 0 : index
    %3 = vector.load %arg9[%c0, %c0_1] : memref<16x128xf32, #tpu.memory_space<vmem>>, vector<16x128xf32>
    %c0_2 = arith.constant 0 : index
    %c0_3 = arith.constant 0 : index
    %4 = vector.load %arg3[%c0_2, %c0_3] : memref<16x128xbf16, #tpu.memory_space<vmem>>, vector<16x128xbf16>
    %c0_4 = arith.constant 0 : index
    %c0_5 = arith.constant 0 : index
    %5 = vector.load %arg4[%c0_4, %c0_5] : memref<128x128xbf16, #tpu.memory_space<vmem>>, vector<128x128xbf16>
    %cst = arith.constant dense<0.000000e+00> : vector<16x128xf32>
    %6 = tpu.matmul %4, %5, %cst {dimension_numbers = #tpu.dot_dimension_numbers<[1], [0], [0], [1], [0, 0, 1, 1], [], []>} : vector<16x128xbf16>, vector<128x128xbf16>, vector<16x128xf32> -> vector<16x128xf32>
    %7 = arith.addf %3, %6 : vector<16x128xf32>
    %c0_6 = arith.constant 0 : index
    %c0_7 = arith.constant 0 : index
    %8 = vector.load %arg9[%c0_6, %c0_7] : memref<16x128xf32, #tpu.memory_space<vmem>>, vector<16x128xf32>
    tpu.vector_store %arg9[%c0_6, %c0_7], %7 {strides = array<i32>} : memref<16x128xf32, #tpu.memory_space<vmem>>, vector<16x128xf32>,
    %c0_i32_8 = arith.constant 0 : i32
    %9 = arith.cmpi eq, %arg2, %c0_i32_8 : i32
    %c0_i32_9 = arith.constant 0 : i32
    %10 = arith.cmpi eq, %arg1, %c0_i32_9 : i32
    %11 = arith.andi %9, %10 : i1
    %12 = arith.extui %11 : i1 to i32
    %c0_i32_10 = arith.constant 0 : i32
    %13 = arith.cmpi ne, %12, %c0_i32_10 : i32
    scf.if %13 {
      %cst_16 = arith.constant 0.000000e+00 : f32
      %22 = vector.broadcast %cst_16 : f32 to vector<16x128xf32>
      %c0_17 = arith.constant 0 : index
      %c0_18 = arith.constant 0 : index
      %23 = vector.load %arg10[%c0_17, %c0_18] : memref<16x128xf32, #tpu.memory_space<vmem>>, vector<16x128xf32>
      tpu.vector_store %arg10[%c0_17, %c0_18], %22 {strides = array<i32>} : memref<16x128xf32, #tpu.memory_space<vmem>>, vector<16x128xf32>,
    } else {
    }
    %c0_i32_11 = arith.constant 0 : i32
    %14 = arith.cmpi eq, %arg2, %c0_i32_11 : i32
    %15 = arith.extui %14 : i1 to i32
    %c0_i32_12 = arith.constant 0 : i32
    %16 = arith.cmpi ne, %15, %c0_i32_12 : i32
    scf.if %16 {
      %c0_16 = arith.constant 0 : index
      %c0_17 = arith.constant 0 : index
      %22 = vector.load %arg9[%c0_16, %c0_17] : memref<16x128xf32, #tpu.memory_space<vmem>>, vector<16x128xf32>
      %c0_18 = arith.constant 0 : index
      %c0_19 = arith.constant 0 : index
      %23 = vector.load %arg5[%c0_18, %c0_19] : memref<1x128xf32, #tpu.memory_space<vmem>>, vector<1x128xf32>
      %24 = vector.broadcast %23 : vector<1x128xf32> to vector<16x128xf32>
      %25 = arith.addf %22, %24 : vector<16x128xf32>
      %cst_20 = arith.constant 0.636619746 : f32
      %26 = math.sqrt %cst_20 : f32
      %cst_21 = arith.constant 5.000000e-01 : f32
      %27 = vector.broadcast %cst_21 : f32 to vector<16x128xf32>
      %28 = arith.mulf %27, %25 : vector<16x128xf32>
      %29 = arith.mulf %25, %25 : vector<16x128xf32>
      %30 = arith.mulf %29, %25 : vector<16x128xf32>
      %cst_22 = arith.constant 4.471500e-02 : f32
      %31 = vector.broadcast %cst_22 : f32 to vector<16x128xf32>
      %32 = arith.mulf %31, %30 : vector<16x128xf32>
      %33 = arith.addf %25, %32 : vector<16x128xf32>
      %34 = vector.broadcast %26 : f32 to vector<16x128xf32>
      %35 = arith.mulf %34, %33 : vector<16x128xf32>
      %36 = math.tanh %35 : vector<16x128xf32>
      %cst_23 = arith.constant 1.000000e+00 : f32
      %37 = vector.broadcast %cst_23 : f32 to vector<16x128xf32>
      %38 = arith.addf %37, %36 : vector<16x128xf32>
      %39 = arith.mulf %28, %38 : vector<16x128xf32>
      %c0_24 = arith.constant 0 : index
      %c0_25 = arith.constant 0 : index
      %40 = vector.load %arg10[%c0_24, %c0_25] : memref<16x128xf32, #tpu.memory_space<vmem>>, vector<16x128xf32>
      %41 = arith.truncf %39 : vector<16x128xf32> to vector<16x128xbf16>
      %c0_26 = arith.constant 0 : index
      %c0_27 = arith.constant 0 : index
      %42 = vector.load %arg6[%c0_26, %c0_27] : memref<128x128xbf16, #tpu.memory_space<vmem>>, vector<128x128xbf16>
      %cst_28 = arith.constant dense<0.000000e+00> : vector<16x128xf32>
      %43 = tpu.matmul %41, %42, %cst_28 {dimension_numbers = #tpu.dot_dimension_numbers<[1], [0], [0], [1], [0, 0, 1, 1], [], []>} : vector<16x128xbf16>, vector<128x128xbf16>, vector<16x128xf32> -> vector<16x128xf32>
      %44 = arith.addf %40, %43 : vector<16x128xf32>
      %c0_29 = arith.constant 0 : index
      %c0_30 = arith.constant 0 : index
      %45 = vector.load %arg10[%c0_29, %c0_30] : memref<16x128xf32, #tpu.memory_space<vmem>>, vector<16x128xf32>
      tpu.vector_store %arg10[%c0_29, %c0_30], %44 {strides = array<i32>} : memref<16x128xf32, #tpu.memory_space<vmem>>, vector<16x128xf32>,
    } else {
    }
    %c0_i32_13 = arith.constant 0 : i32
    %17 = arith.cmpi eq, %arg2, %c0_i32_13 : i32
    %c0_i32_14 = arith.constant 0 : i32
    %18 = arith.cmpi eq, %arg1, %c0_i32_14 : i32
    %19 = arith.andi %17, %18 : i1
    %20 = arith.extui %19 : i1 to i32
    %c0_i32_15 = arith.constant 0 : i32
    %21 = arith.cmpi ne, %20, %c0_i32_15 : i32
    scf.if %21 {
      %c0_16 = arith.constant 0 : index
      %c0_17 = arith.constant 0 : index
      %22 = vector.load %arg10[%c0_16, %c0_17] : memref<16x128xf32, #tpu.memory_space<vmem>>, vector<16x128xf32>
      %c0_18 = arith.constant 0 : index
      %c0_19 = arith.constant 0 : index
      %23 = vector.load %arg7[%c0_18, %c0_19] : memref<1x128xf32, #tpu.memory_space<vmem>>, vector<1x128xf32>
      %24 = vector.broadcast %23 : vector<1x128xf32> to vector<16x128xf32>
      %25 = arith.addf %22, %24 : vector<16x128xf32>
      %c0_20 = arith.constant 0 : index
      %c0_21 = arith.constant 0 : index
      %26 = vector.load %arg8[%c0_20, %c0_21] : memref<16x128xf32, #tpu.memory_space<vmem>>, vector<16x128xf32>
      tpu.vector_store %arg8[%c0_20, %c0_21], %25 {strides = array<i32>} : memref<16x128xf32, #tpu.memory_space<vmem>>, vector<16x128xf32>,
    } else {
    }
    return
  }
  func.func @transform_0(%arg0: i32, %arg1: i32, %arg2: i32) -> (i32, i32) {
    %c0_i32 = arith.constant 0 : i32
    return %arg0, %arg2 : i32, i32
  }
  func.func @transform_1(%arg0: i32, %arg1: i32, %arg2: i32) -> (i32, i32) {
    %c0_i32 = arith.constant 0 : i32
    return %arg2, %arg1 : i32, i32
  }
  func.func @transform_2(%arg0: i32, %arg1: i32, %arg2: i32) -> (i32, i32) {
    %c0_i32 = arith.constant 0 : i32
    %c0_i32_0 = arith.constant 0 : i32
    return %c0_i32, %arg1 : i32, i32
  }
  func.func @transform_3(%arg0: i32, %arg1: i32, %arg2: i32) -> (i32, i32) {
    %c0_i32 = arith.constant 0 : i32
    %c0_i32_0 = arith.constant 0 : i32
    return %arg1, %c0_i32 : i32, i32
  }
  func.func @transform_4(%arg0: i32, %arg1: i32, %arg2: i32) -> (i32, i32) {
    %c0_i32 = arith.constant 0 : i32
    %c0_i32_0 = arith.constant 0 : i32
    %c0_i32_1 = arith.constant 0 : i32
    return %c0_i32, %c0_i32_0 : i32, i32
  }
  func.func @transform_5(%arg0: i32, %arg1: i32, %arg2: i32) -> (i32, i32) {
    %c0_i32 = arith.constant 0 : i32
    %c0_i32_0 = arith.constant 0 : i32
    return %arg0, %c0_i32 : i32, i32
  }
}

</mosaic_0001>

<llo_original>
// kernel: feed_forward.1
$region0: #{feed_forward.1}
  #allocation0 [shape = 'u32[]', space=smem, size = 0x4, offset = 0x4, fixed_abs, tag = 'smem constant byte address 0x4 - core index']
  #allocation1 [shape = 'u32[144,128]{1,0:T(1,128)}', space=vmem, size = 0x12000, scoped, tag = 'internal scratch']
  #allocation2 [shape = 'f32[16,128]{1,0:T(8,128)}', space=vmem, size = 0x2000, scoped, tag = 'scratch operand']
  #allocation3 [shape = 'f32[16,128]{1,0:T(8,128)}', space=vmem, size = 0x2000, scoped, tag = 'scratch operand']
  %s0 = inlined_call_operand.vmem [shape: bf16[16,128], index: 0, kind: input, shape index: {}]
  %s1 = inlined_call_operand.hbm [shape: bf16[128,128], index: 1, kind: input, shape index: {}]
  %s2 = inlined_call_operand.vmem [shape: f32[1,128], index: 2, kind: input, shape index: {}]
  %s3 = inlined_call_operand.hbm [shape: bf16[128,128], index: 3, kind: input, shape index: {}]
  %s4 = inlined_call_operand.vmem [shape: f32[1,128], index: 4, kind: input, shape index: {}]
  %s5 = inlined_call_operand.vmem [shape: f32[16,128], index: 5, kind: output, shape index: {}]
  %s6 = sld [smem:[#allocation0]]
  $region54: #{feed_forward.1} parent=0
    _
  %s8 = ssub.s32 1, %s6
  %s9 = scalar_select 0, %s8, %s6
  $region1: #{feed_forward.1} parent=0
    #allocation4 [shape = 'u8[32768]{0}', space=vmem, size = 0x8000, scoped, tag = 'input window, operand 1, single buffered']
    #allocation5 [shape = 's32[1]{0}', space=sflag, size = 0x4, scoped, tag = 'scoped memory for feed_forward.1']
    #allocation6 [shape = 'u8[32768]{0}', space=vmem, size = 0x8000, scoped, tag = 'input window, operand 3, single buffered']
    #allocation7 [shape = 's32[1]{0}', space=sflag, size = 0x4, scoped, tag = 'scoped memory for feed_forward.1']
    %10 = vsyncpa [#allocation5], 0
    %11 = vsyncpa [#allocation7], 0
    // Predicated region
    $region2: #{feed_forward.1} parent=1 // pred_check
      _
    $region3: #{feed_forward.1} parent=1 // pred_check_branch
      %13 = sbr.rel (0) target = $region5
    $region4: #{feed_forward.1} parent=1 // pred_region
      _
    $region5: #{feed_forward.1} parent=1 // pred_fallthru
      _
    // Predicated region
    $region6: #{feed_forward.1} parent=1 // pred_check
      _
    $region7: #{feed_forward.1} parent=1 // pred_check_branch
      %15 = sbr.rel (0) target = $region9
    $region8: #{feed_forward.1} parent=1 // pred_region
      %s17 = ssub.s32 1024, 1024
      %18 = vsyncadd [#allocation5], %s17
      %s19 = sshll.u32 [#allocation4], 4
      %s20 = int_to_ptr.vmem [resolvable:$true] %s19
      %25 = dma.hbm_to_vmem [thread:$0]  %s1, 1024, %s20, [#allocation5], 64, 64, 4
    $region9: #{feed_forward.1} parent=1 // pred_fallthru
      _
    // Predicated region
    $region10: #{feed_forward.1} parent=1 // pred_check
      _
    $region11: #{feed_forward.1} parent=1 // pred_check_branch
      %27 = sbr.rel (0) target = $region13
    $region12: #{feed_forward.1} parent=1 // pred_region
      _
    $region13: #{feed_forward.1} parent=1 // pred_fallthru
      _
    // Predicated region
    $region14: #{feed_forward.1} parent=1 // pred_check
      _
    $region15: #{feed_forward.1} parent=1 // pred_check_branch
      %29 = sbr.rel (0) target = $region17
    $region16: #{feed_forward.1} parent=1 // pred_region
      %s31 = ssub.s32 1024, 1024
      %32 = vsyncadd [#allocation7], %s31
      %s33 = sshll.u32 [#allocation6], 4
      %s34 = int_to_ptr.vmem [resolvable:$true] %s33
      %39 = dma.hbm_to_vmem [thread:$0]  %s3, 1024, %s34, [#allocation7], 64, 64, 4
    $region17: #{feed_forward.1} parent=1 // pred_fallthru
      _
    // Predicated region
    $region18: #{feed_forward.1} parent=1 // pred_check
      _
    $region19: #{feed_forward.1} parent=1 // pred_check_branch
      %41 = sbr.rel (0) target = $region21
    $region20: #{feed_forward.1} parent=1 // pred_region
      _
    $region21: #{feed_forward.1} parent=1 // pred_fallthru
      _
    // Predicated region
    $region22: #{feed_forward.1} parent=1 // pred_check
      _
    $region23: #{feed_forward.1} parent=1 // pred_check_branch
      %43 = sbr.rel (0) target = $region25
    $region24: #{feed_forward.1} parent=1 // pred_region
      %44 = dma.done [#allocation5], 1024
    $region25: #{feed_forward.1} parent=1 // pred_fallthru
      _
    // Predicated region
    $region26: #{feed_forward.1} parent=1 // pred_check
      _
    $region27: #{feed_forward.1} parent=1 // pred_check_branch
      %46 = sbr.rel (0) target = $region29
    $region28: #{feed_forward.1} parent=1 // pred_region
      %47 = dma.done [#allocation7], 1024
    $region29: #{feed_forward.1} parent=1 // pred_fallthru
      _
    %p49 = scmp.eq.s32.totalorder 0, 0
    // Predicated region
    $region30: #{feed_forward.1} parent=1 // pred_check
      %p50 = pneg %p49
    $region31: #{feed_forward.1} parent=1 // pred_check_branch
      %52 = sbr.rel (%p50) target = $region33
    $region32: #{feed_forward.1} parent=1 // pred_region
      %53 = vst [vmem:[#allocation2] sm:$0xff] 0.0
      %54 = vst [vmem:[#allocation2 + $0x8] sm:$0xff] 0.0
    $region33: #{feed_forward.1} parent=1 // pred_fallthru
      _
    %v55 = vld [vmem:[#allocation2] sm:$0xff]
    %v56 = vld [vmem:[#allocation2 + $0x8] sm:$0xff]
    %v57 = vld [vmem:[%s0] sm:$0xf]
    %v58 = vld [vmem:[%s0 + $0x4] sm:$0xf]
    %v59 = vld [vmem:[#allocation4] sm:$0xf]
    %v60 = vld [vmem:[#allocation4 + $0x4] sm:$0xf]
    %v61 = vld [vmem:[#allocation4 + $0x8] sm:$0xf]
    %v62 = vld [vmem:[#allocation4 + $0xc] sm:$0xf]
    %v63 = vld [vmem:[#allocation4 + $0x10] sm:$0xf]
    %v64 = vld [vmem:[#allocation4 + $0x14] sm:$0xf]
    %v65 = vld [vmem:[#allocation4 + $0x18] sm:$0xf]
    %v66 = vld [vmem:[#allocation4 + $0x1c] sm:$0xf]
    %v67 = vld [vmem:[#allocation4 + $0x20] sm:$0xf]
    %v68 = vld [vmem:[#allocation4 + $0x24] sm:$0xf]
    %v69 = vld [vmem:[#allocation4 + $0x28] sm:$0xf]
    %v70 = vld [vmem:[#allocation4 + $0x2c] sm:$0xf]
    %v71 = vld [vmem:[#allocation4 + $0x30] sm:$0xf]
    %v72 = vld [vmem:[#allocation4 + $0x34] sm:$0xf]
    %v73 = vld [vmem:[#allocation4 + $0x38] sm:$0xf]
    %v74 = vld [vmem:[#allocation4 + $0x3c] sm:$0xf]
    %v77 = vunpack.c.l.b16 %v57
    %v78 = vunpack.c.l.b16 %v58
    %v79 = vpack.c.b16 %v78, %v77
    %v97 = vunpack.c.l.b16 %v59
    %v98 = vunpack.c.l.b16 %v60
    %v99 = vunpack.c.l.b16 %v61
    %v100 = vunpack.c.l.b16 %v62
    %v101 = vunpack.c.l.b16 %v63
    %v102 = vunpack.c.l.b16 %v64
    %v103 = vunpack.c.l.b16 %v65
    %v104 = vunpack.c.l.b16 %v66
    %v105 = vunpack.c.l.b16 %v67
    %v106 = vunpack.c.l.b16 %v68
    %v107 = vunpack.c.l.b16 %v69
    %v108 = vunpack.c.l.b16 %v70
    %v109 = vunpack.c.l.b16 %v71
    %v110 = vunpack.c.l.b16 %v72
    %v111 = vunpack.c.l.b16 %v73
    %v112 = vunpack.c.l.b16 %v74
    %v113 = vpack.c.b16 %v98, %v97
    %v114 = vpack.c.b16 %v100, %v99
    %v115 = vpack.c.b16 %v102, %v101
    %v116 = vpack.c.b16 %v104, %v103
    %v117 = vpack.c.b16 %v106, %v105
    %v118 = vpack.c.b16 %v108, %v107
    %v119 = vpack.c.b16 %v110, %v109
    %v120 = vpack.c.b16 %v112, %v111
    %129 = vmatprep.subr.bf16.mxu0 0
    %130 = vmatpush1.bf16.msra.mxu0 %v113
    %131 = vmatprep.subr.bf16.mxu0 0
    %132 = vmatpush1.bf16.msra.mxu0 %v114
    %133 = vmatprep.subr.bf16.mxu0 0
    %134 = vmatpush1.bf16.msra.mxu0 %v115
    %135 = vmatprep.subr.bf16.mxu0 0
    %136 = vmatpush1.bf16.msra.mxu0 %v116
    %137 = vmatprep.subr.bf16.mxu0 0
    %138 = vmatpush1.bf16.msra.mxu0 %v117
    %139 = vmatprep.subr.bf16.mxu0 0
    %140 = vmatpush1.bf16.msra.mxu0 %v118
    %141 = vmatprep.subr.bf16.mxu0 0
    %142 = vmatpush1.bf16.msra.mxu0 %v119
    %143 = vmatprep.subr.bf16.mxu0 0
    %144 = vmatpush1.bf16.msra.mxu0 %v120
    %145 = vmatprep.subr.bf16.mxu0 0
    %146 = vmatpush1.bf16.msra.mxu0 0
    %147 = vmatprep.subr.bf16.mxu0 0
    %148 = vmatpush1.bf16.msra.mxu0 0
    %149 = vmatprep.subr.bf16.mxu0 0
    %150 = vmatpush1.bf16.msra.mxu0 0
    %151 = vmatprep.subr.bf16.mxu0 0
    %152 = vmatpush1.bf16.msra.mxu0 0
    %153 = vmatprep.subr.bf16.mxu0 0
    %154 = vmatpush1.bf16.msra.mxu0 0
    %155 = vmatprep.subr.bf16.mxu0 0
    %156 = vmatpush1.bf16.msra.mxu0 0
    %157 = vmatprep.subr.bf16.mxu0 0
    %158 = vmatpush1.bf16.msra.mxu0 0
    %159 = vmatprep.subr.bf16.mxu0 0
    %160 = vmatpush1.bf16.msra.mxu0 0
    %161 = vmatprep.mubr.bf16.mxu0 0
    %162 = vmatmul.mubr.bf16.gmra.mrb[0].mxu0 %v79
    %v163 = vpop.f32.mrb[0].mxu0
    %v164 = vadd.f32 0.0, %v163
    %v165 = vpop.f32.mrb[0].mxu0
    %v166 = vpop.f32.mrb[0].mxu0
    %v167 = vadd.f32 0.0, %v166
    %v168 = vpop.f32.mrb[0].mxu0
    %169 = vdwg.mxu0
    %v170 = vadd.f32 %v55, %v164
    %v171 = vadd.f32 %v56, %v167
    %172 = vst [vmem:[#allocation2] sm:$0xff] %v170
    %173 = vst [vmem:[#allocation2 + $0x8] sm:$0xff] %v171
    %p174 = scmp.eq.s32.totalorder 0, 0
    %p175 = pnand %p49, %p174
    %p176 = pneg %p175
    // Predicated region
    $region34: #{feed_forward.1} parent=1 // pred_check
      _
    $region35: #{feed_forward.1} parent=1 // pred_check_branch
      %178 = sbr.rel (%p175) target = $region37
    $region36: #{feed_forward.1} parent=1 // pred_region
      %179 = vst [vmem:[#allocation3] sm:$0xff] 0.0
      %180 = vst [vmem:[#allocation3 + $0x8] sm:$0xff] 0.0
    $region37: #{feed_forward.1} parent=1 // pred_fallthru
      _
    // Predicated region
    $region38: #{feed_forward.1} parent=1 // pred_check
      %p181 = pneg %p49
    $region39: #{feed_forward.1} parent=1 // pred_check_branch
      %183 = sbr.rel (%p181) target = $region41
    $region40: #{feed_forward.1} parent=1 // pred_region
      %v184 = vld [vmem:[#allocation2] sm:$0xff]
      %v185 = vld [vmem:[#allocation2 + $0x8] sm:$0xff]
      %v186 = vld [vmem:[%s2] sm:$0x1]
      %v188 = vlaneseq
      %v189 = vshrl.u32 %v188, 7
      %v190 = vsub.s32 0, %v189
      %v191 = vrot.slane %v186, %v190
      %v193 = vadd.f32 %v184, %v191
      %v194 = vadd.f32 %v185, %v191
      %v195 = vmul.f32 %v193, 0.5
      %v196 = vmul.f32 %v194, 0.5
      %v197 = vmul.f32 %v193, %v193
      %v198 = vmul.f32 %v194, %v194
      %v199 = vmul.f32 %v197, %v193
      %v200 = vmul.f32 %v198, %v194
      %v201 = vmul.f32 %v199, 0.044715
      %v202 = vmul.f32 %v200, 0.044715
      %v203 = vadd.f32 %v193, %v201
      %v204 = vadd.f32 %v194, %v202
      %v205 = vmul.f32 %v203, 0.7978845
      %v206 = vmul.f32 %v204, 0.7978845
      %v207 = vtanh.pop %v205
      %v208 = vtanh.pop %v206
      %v209 = vadd.f32 %v207, 1.0
      %v210 = vadd.f32 %v208, 1.0
      %v211 = vmul.f32 %v195, %v209
      %v212 = vmul.f32 %v196, %v210
      %v213 = vld [vmem:[#allocation3] sm:$0xff]
      %v214 = vld [vmem:[#allocation3 + $0x8] sm:$0xff]
      %v215 = vpack.c.bf16 %v212, %v211
      %v216 = vld [vmem:[#allocation6] sm:$0xf]
      %v217 = vld [vmem:[#allocation6 + $0x4] sm:$0xf]
      %v218 = vld [vmem:[#allocation6 + $0x8] sm:$0xf]
      %v219 = vld [vmem:[#allocation6 + $0xc] sm:$0xf]
      %v220 = vld [vmem:[#allocation6 + $0x10] sm:$0xf]
      %v221 = vld [vmem:[#allocation6 + $0x14] sm:$0xf]
      %v222 = vld [vmem:[#allocation6 + $0x18] sm:$0xf]
      %v223 = vld [vmem:[#allocation6 + $0x1c] sm:$0xf]
      %v224 = vld [vmem:[#allocation6 + $0x20] sm:$0xf]
      %v225 = vld [vmem:[#allocation6 + $0x24] sm:$0xf]
      %v226 = vld [vmem:[#allocation6 + $0x28] sm:$0xf]
      %v227 = vld [vmem:[#allocation6 + $0x2c] sm:$0xf]
      %v228 = vld [vmem:[#allocation6 + $0x30] sm:$0xf]
      %v229 = vld [vmem:[#allocation6 + $0x34] sm:$0xf]
      %v230 = vld [vmem:[#allocation6 + $0x38] sm:$0xf]
      %v231 = vld [vmem:[#allocation6 + $0x3c] sm:$0xf]
      %v248 = vunpack.c.l.b16 %v216
      %v249 = vunpack.c.l.b16 %v217
      %v250 = vunpack.c.l.b16 %v218
      %v251 = vunpack.c.l.b16 %v219
      %v252 = vunpack.c.l.b16 %v220
      %v253 = vunpack.c.l.b16 %v221
      %v254 = vunpack.c.l.b16 %v222
      %v255 = vunpack.c.l.b16 %v223
      %v256 = vunpack.c.l.b16 %v224
      %v257 = vunpack.c.l.b16 %v225
      %v258 = vunpack.c.l.b16 %v226
      %v259 = vunpack.c.l.b16 %v227
      %v260 = vunpack.c.l.b16 %v228
      %v261 = vunpack.c.l.b16 %v229
      %v262 = vunpack.c.l.b16 %v230
      %v263 = vunpack.c.l.b16 %v231
      %v264 = vpack.c.b16 %v249, %v248
      %v265 = vpack.c.b16 %v251, %v250
      %v266 = vpack.c.b16 %v253, %v252
      %v267 = vpack.c.b16 %v255, %v254
      %v268 = vpack.c.b16 %v257, %v256
      %v269 = vpack.c.b16 %v259, %v258
      %v270 = vpack.c.b16 %v261, %v260
      %v271 = vpack.c.b16 %v263, %v262
      %280 = vmatprep.subr.bf16.mxu0 0
      %281 = vmatpush1.bf16.msra.mxu0 %v264
      %282 = vmatprep.subr.bf16.mxu0 0
      %283 = vmatpush1.bf16.msra.mxu0 %v265
      %284 = vmatprep.subr.bf16.mxu0 0
      %285 = vmatpush1.bf16.msra.mxu0 %v266
      %286 = vmatprep.subr.bf16.mxu0 0
      %287 = vmatpush1.bf16.msra.mxu0 %v267
      %288 = vmatprep.subr.bf16.mxu0 0
      %289 = vmatpush1.bf16.msra.mxu0 %v268
      %290 = vmatprep.subr.bf16.mxu0 0
      %291 = vmatpush1.bf16.msra.mxu0 %v269
      %292 = vmatprep.subr.bf16.mxu0 0
      %293 = vmatpush1.bf16.msra.mxu0 %v270
      %294 = vmatprep.subr.bf16.mxu0 0
      %295 = vmatpush1.bf16.msra.mxu0 %v271
      %296 = vmatprep.subr.bf16.mxu0 0
      %297 = vmatpush1.bf16.msra.mxu0 0
      %298 = vmatprep.subr.bf16.mxu0 0
      %299 = vmatpush1.bf16.msra.mxu0 0
      %300 = vmatprep.subr.bf16.mxu0 0
      %301 = vmatpush1.bf16.msra.mxu0 0
      %302 = vmatprep.subr.bf16.mxu0 0
      %303 = vmatpush1.bf16.msra.mxu0 0
      %304 = vmatprep.subr.bf16.mxu0 0
      %305 = vmatpush1.bf16.msra.mxu0 0
      %306 = vmatprep.subr.bf16.mxu0 0
      %307 = vmatpush1.bf16.msra.mxu0 0
      %308 = vmatprep.subr.bf16.mxu0 0
      %309 = vmatpush1.bf16.msra.mxu0 0
      %310 = vmatprep.subr.bf16.mxu0 0
      %311 = vmatpush1.bf16.msra.mxu0 0
      %312 = vmatprep.mubr.bf16.mxu0 0
      %313 = vmatmul.mubr.bf16.gmra.mrb[0].mxu0 %v215
      %v314 = vpop.f32.mrb[0].mxu0
      %v315 = vadd.f32 0.0, %v314
      %v316 = vpop.f32.mrb[0].mxu0
      %v317 = vpop.f32.mrb[0].mxu0
      %v318 = vadd.f32 0.0, %v317
      %v319 = vpop.f32.mrb[0].mxu0
      %320 = vdwg.mxu0
      %v321 = vadd.f32 %v213, %v315
      %v322 = vadd.f32 %v214, %v318
      %323 = vst [vmem:[#allocation3] sm:$0xff] %v321
      %324 = vst [vmem:[#allocation3 + $0x8] sm:$0xff] %v322
    $region41: #{feed_forward.1} parent=1 // pred_fallthru
      _
    // Predicated region
    $region42: #{feed_forward.1} parent=1 // pred_check
      _
    $region43: #{feed_forward.1} parent=1 // pred_check_branch
      %326 = sbr.rel (%p175) target = $region45
    $region44: #{feed_forward.1} parent=1 // pred_region
      %v327 = vld [vmem:[#allocation3] sm:$0xff]
      %v328 = vld [vmem:[#allocation3 + $0x8] sm:$0xff]
      %v329 = vld [vmem:[%s4] sm:$0x1]
      %v331 = vlaneseq
      %v332 = vshrl.u32 %v331, 7
      %v333 = vsub.s32 0, %v332
      %v334 = vrot.slane %v329, %v333
      %v336 = vadd.f32 %v327, %v334
      %v337 = vadd.f32 %v328, %v334
      %338 = vst [vmem:[%s5] sm:$0xff] %v336
      %339 = vst [vmem:[%s5 + $0x8] sm:$0xff] %v337
    $region45: #{feed_forward.1} parent=1 // pred_fallthru
      _
    // Predicated region
    $region46: #{feed_forward.1} parent=1 // pred_check
      _
    $region47: #{feed_forward.1} parent=1 // pred_check_branch
      %341 = sbr.rel (0) target = $region49
    $region48: #{feed_forward.1} parent=1 // pred_region
      _
    $region49: #{feed_forward.1} parent=1 // pred_fallthru
      _
    // Predicated region
    $region50: #{feed_forward.1} parent=1 // pred_check
      _
    $region51: #{feed_forward.1} parent=1 // pred_check_branch
      %343 = sbr.rel (0) target = $region53
    $region52: #{feed_forward.1} parent=1 // pred_region
      _
    $region53: #{feed_forward.1} parent=1 // pred_fallthru
      _
    %344 = vsyncpa [#allocation5], 1
    %345 = vsyncpa [#allocation7], 1

</llo_original>
